<compile_context>
chip_gen: v5e
topology: v5e:2x2
jax: 0.10.0
libtpu: 0.0.40
codegen_flags: <defaults>
</compile_context>

<pallas_src>
import random

import jax
import jax.numpy as jnp
from jax import lax
from jax.experimental import pallas as pl
from jax.experimental.pallas import tpu as pltpu

_LANE = 128
_SUBLANE = 8


def _kth_largest_kernel(k_ref, x_ref, o_ref):
    # k_ref : SMEM scalar-prefetch, shape (1,) int32 -> descending-sort index
    # x_ref : (Np, TM) block — Np (padded) points on sublanes, TM rows on lanes
    # o_ref : (1, TM) lane-dense output block
    x = x_ref[...]
    # bf16 compares are native on v6e/v7x (Mosaic upcasts on v5e); promote
    # anything that is neither f32 nor bf16 to f32.
    if x.dtype not in (jnp.float32, jnp.bfloat16):
        x = x.astype(jnp.float32)
    k = k_ref[0]
    n = x.shape[0]

    # c_gt[i, r] = #{ j : x[j, r] > x[i, r] }  via sublane rotate-compare.
    # n - 1 rotations: the identity shift (x_i > x_i) contributes nothing.
    def body(_, carry):
        rolled, c_gt = carry
        rolled = pltpu.roll(rolled, 1, axis=0)           # XLU slot, overlaps VALU
        c_gt = c_gt + (rolled > x).astype(jnp.int32)     # 1 cmp + 1 add per step
        return rolled, c_gt

    steps = n - 1
    unroll = steps if steps <= 64 else 8
    _, c_gt = lax.fori_loop(
        0, steps, body, (x, jnp.zeros(x.shape, jnp.int32)), unroll=unroll)

    # k-th descending order statistic = min over candidates with rank <= k.
    # NOTE: NaNs compare false everywhere, so a row containing NaN yields +inf
    # (torch.sort instead places NaNs deterministically).
    pos_inf = jnp.array(jnp.inf, dtype=x.dtype)
    cand = jnp.where(c_gt <= k, x, pos_inf)
    o_ref[...] = jnp.min(cand, axis=0, keepdims=True).astype(o_ref.dtype)


def _pick_row_tile(n_points, m_padded, vmem_budget_bytes=16 << 20):
    """Largest multiple-of-128 row tile whose live working set (~8 (Np, TM)
    32-bit slabs: double-buffered input + x / rolled / c_gt / candidates)
    stays under a budget that also fits v7x's smaller scoped VMEM."""
    tm = vmem_budget_bytes // max(1, 8 * n_points * 4)
    tm = max(_LANE, min(2048, (tm // _LANE) * _LANE))
    return min(tm, m_padded)


def recycle_dual_point(x, k):
    """x: (B, C, N) float array, k: python int in [0, N-1]. Returns (B, C)."""
    B, C, N = x.shape
    assert 0 <= k < N, "k must index into the point axis"
    M = B * C

    # Transposed slab: points on sublanes, rows on lanes (lane-dense output).
    xt = jnp.transpose(x.reshape(M, N))                     # (N, M)

    # Pad the point axis to a sublane multiple with -inf: padded points are
    # never candidates unless the true answer is -inf (still correct then).
    Np = pl.cdiv(N, _SUBLANE) * _SUBLANE
    if Np != N:
        xt = jnp.pad(xt, ((0, Np - N), (0, 0)), constant_values=-jnp.inf)

    # Tile the row/lane axis; pad rows so every tile is dense and unmasked.
    Mp = pl.cdiv(M, _LANE) * _LANE
    TM = _pick_row_tile(Np, Mp)
    Mp = pl.cdiv(Mp, TM) * TM                               # multiple of TM
    if Mp != M:
        xt = jnp.pad(xt, ((0, 0), (0, Mp - M)))

    k_arr = jnp.asarray([k], dtype=jnp.int32)

    out = pl.pallas_call(
        _kth_largest_kernel,
        out_shape=jax.ShapeDtypeStruct((1, Mp), x.dtype),
        grid_spec=pltpu.PrefetchScalarGridSpec(
            num_scalar_prefetch=1,
            grid=(Mp // TM,),
            in_specs=[pl.BlockSpec((Np, TM), lambda i, k_ref: (0, i))],
            out_specs=pl.BlockSpec((1, TM), lambda i, k_ref: (0, i)),
        ),
        compiler_params=pltpu.CompilerParams(
            # Row-tile axis is independent -> megacore sharding on v7x.
            dimension_semantics=("parallel",)),
    )(k_arr, xt)

    # TODO(synk): for large N (>= ~256) replace the O(N^2) rotate-compare with
    # a 32-pass bitwise radix-select (order-preserving uint32 + per-bit rank).

    # .detach() equivalent
    return lax.stop_gradient(out[0, :M].reshape(B, C))


if __name__ == "__main__":
    B, C, N = 2, 4, 16

    key = jax.random.PRNGKey(0)
    x = jax.random.normal(key, (B, C, N), dtype=jnp.float32)

    # Mimic `random.randint(1, N - 1)` from the PyTorch forward, deterministically.
    random.seed(0)
    k = random.randint(1, N - 1)

    out = jax.block_until_ready(recycle_dual_point(x, k))

    # Reference: descending sort along the point axis, take index k.
    ref = jnp.flip(jnp.sort(x, axis=2), axis=2)[:, :, k]
    assert out.shape == (B, C), out.shape
    assert jnp.allclose(out, ref), (out, ref)

    print("KERNEL_OK")
</pallas_src>

<mosaic_0001>
module attributes {stable_mosaic.version = 11 : i64} {
  func.func @_kth_largest_kernel(%arg0: i32, %arg1: memref<1xi32, #tpu.memory_space<smem>>, %arg2: memref<16x128xf32, #tpu.memory_space<vmem>>, %arg3: memref<1x128xf32, #tpu.memory_space<vmem>>) attributes {dimension_semantics = [#tpu.dimension_semantics<parallel>], iteration_bounds = array<i64: 1>, scalar_prefetch = 1 : i64, scratch_operands = 0 : i64, tpu.core_type = #tpu.core_type<tc>, window_params = [{transform_indices = @transform_0, window_bounds = array<i64: 16, 128>}, {transform_indices = @transform_1, window_bounds = array<i64: 1, 128>}]} {
    %c0 = arith.constant 0 : index
    %c0_0 = arith.constant 0 : index
    %0 = vector.load %arg2[%c0, %c0_0] : memref<16x128xf32, #tpu.memory_space<vmem>>, vector<16x128xf32>
    %c0_1 = arith.constant 0 : index
    %1 = memref.load %arg1[%c0_1] : memref<1xi32, #tpu.memory_space<smem>>
    %c0_i32 = arith.constant 0 : i32
    %2 = vector.broadcast %c0_i32 : i32 to vector<16x128xi32>
    %c0_i32_2 = arith.constant 0 : i32
    %c1_i32 = arith.constant 1 : i32
    %3 = tpu.dynamic_rotate %0 by %c1_i32 dim 0 : vector<16x128xf32>, i32 -> vector<16x128xf32>
    %4 = arith.cmpf ogt, %3, %0 : vector<16x128xf32>
    %5 = arith.extui %4 : vector<16x128xi1> to vector<16x128xi32>
    %6 = arith.addi %2, %5 : vector<16x128xi32>
    %c1_i32_3 = arith.constant 1 : i32
    %c1_i32_4 = arith.constant 1 : i32
    %7 = tpu.dynamic_rotate %3 by %c1_i32_4 dim 0 : vector<16x128xf32>, i32 -> vector<16x128xf32>
    %8 = arith.cmpf ogt, %7, %0 : vector<16x128xf32>
    %9 = arith.extui %8 : vector<16x128xi1> to vector<16x128xi32>
    %10 = arith.addi %6, %9 : vector<16x128xi32>
    %c2_i32 = arith.constant 2 : i32
    %c1_i32_5 = arith.constant 1 : i32
    %11 = tpu.dynamic_rotate %7 by %c1_i32_5 dim 0 : vector<16x128xf32>, i32 -> vector<16x128xf32>
    %12 = arith.cmpf ogt, %11, %0 : vector<16x128xf32>
    %13 = arith.extui %12 : vector<16x128xi1> to vector<16x128xi32>
    %14 = arith.addi %10, %13 : vector<16x128xi32>
    %c3_i32 = arith.constant 3 : i32
    %c1_i32_6 = arith.constant 1 : i32
    %15 = tpu.dynamic_rotate %11 by %c1_i32_6 dim 0 : vector<16x128xf32>, i32 -> vector<16x128xf32>
    %16 = arith.cmpf ogt, %15, %0 : vector<16x128xf32>
    %17 = arith.extui %16 : vector<16x128xi1> to vector<16x128xi32>
    %18 = arith.addi %14, %17 : vector<16x128xi32>
    %c4_i32 = arith.constant 4 : i32
    %c1_i32_7 = arith.constant 1 : i32
    %19 = tpu.dynamic_rotate %15 by %c1_i32_7 dim 0 : vector<16x128xf32>, i32 -> vector<16x128xf32>
    %20 = arith.cmpf ogt, %19, %0 : vector<16x128xf32>
    %21 = arith.extui %20 : vector<16x128xi1> to vector<16x128xi32>
    %22 = arith.addi %18, %21 : vector<16x128xi32>
    %c5_i32 = arith.constant 5 : i32
    %c1_i32_8 = arith.constant 1 : i32
    %23 = tpu.dynamic_rotate %19 by %c1_i32_8 dim 0 : vector<16x128xf32>, i32 -> vector<16x128xf32>
    %24 = arith.cmpf ogt, %23, %0 : vector<16x128xf32>
    %25 = arith.extui %24 : vector<16x128xi1> to vector<16x128xi32>
    %26 = arith.addi %22, %25 : vector<16x128xi32>
    %c6_i32 = arith.constant 6 : i32
    %c1_i32_9 = arith.constant 1 : i32
    %27 = tpu.dynamic_rotate %23 by %c1_i32_9 dim 0 : vector<16x128xf32>, i32 -> vector<16x128xf32>
    %28 = arith.cmpf ogt, %27, %0 : vector<16x128xf32>
    %29 = arith.extui %28 : vector<16x128xi1> to vector<16x128xi32>
    %30 = arith.addi %26, %29 : vector<16x128xi32>
    %c7_i32 = arith.constant 7 : i32
    %c1_i32_10 = arith.constant 1 : i32
    %31 = tpu.dynamic_rotate %27 by %c1_i32_10 dim 0 : vector<16x128xf32>, i32 -> vector<16x128xf32>
    %32 = arith.cmpf ogt, %31, %0 : vector<16x128xf32>
    %33 = arith.extui %32 : vector<16x128xi1> to vector<16x128xi32>
    %34 = arith.addi %30, %33 : vector<16x128xi32>
    %c8_i32 = arith.constant 8 : i32
    %c1_i32_11 = arith.constant 1 : i32
    %35 = tpu.dynamic_rotate %31 by %c1_i32_11 dim 0 : vector<16x128xf32>, i32 -> vector<16x128xf32>
    %36 = arith.cmpf ogt, %35, %0 : vector<16x128xf32>
    %37 = arith.extui %36 : vector<16x128xi1> to vector<16x128xi32>
    %38 = arith.addi %34, %37 : vector<16x128xi32>
    %c9_i32 = arith.constant 9 : i32
    %c1_i32_12 = arith.constant 1 : i32
    %39 = tpu.dynamic_rotate %35 by %c1_i32_12 dim 0 : vector<16x128xf32>, i32 -> vector<16x128xf32>
    %40 = arith.cmpf ogt, %39, %0 : vector<16x128xf32>
    %41 = arith.extui %40 : vector<16x128xi1> to vector<16x128xi32>
    %42 = arith.addi %38, %41 : vector<16x128xi32>
    %c10_i32 = arith.constant 10 : i32
    %c1_i32_13 = arith.constant 1 : i32
    %43 = tpu.dynamic_rotate %39 by %c1_i32_13 dim 0 : vector<16x128xf32>, i32 -> vector<16x128xf32>
    %44 = arith.cmpf ogt, %43, %0 : vector<16x128xf32>
    %45 = arith.extui %44 : vector<16x128xi1> to vector<16x128xi32>
    %46 = arith.addi %42, %45 : vector<16x128xi32>
    %c11_i32 = arith.constant 11 : i32
    %c1_i32_14 = arith.constant 1 : i32
    %47 = tpu.dynamic_rotate %43 by %c1_i32_14 dim 0 : vector<16x128xf32>, i32 -> vector<16x128xf32>
    %48 = arith.cmpf ogt, %47, %0 : vector<16x128xf32>
    %49 = arith.extui %48 : vector<16x128xi1> to vector<16x128xi32>
    %50 = arith.addi %46, %49 : vector<16x128xi32>
    %c12_i32 = arith.constant 12 : i32
    %c1_i32_15 = arith.constant 1 : i32
    %51 = tpu.dynamic_rotate %47 by %c1_i32_15 dim 0 : vector<16x128xf32>, i32 -> vector<16x128xf32>
    %52 = arith.cmpf ogt, %51, %0 : vector<16x128xf32>
    %53 = arith.extui %52 : vector<16x128xi1> to vector<16x128xi32>
    %54 = arith.addi %50, %53 : vector<16x128xi32>
    %c13_i32 = arith.constant 13 : i32
    %c1_i32_16 = arith.constant 1 : i32
    %55 = tpu.dynamic_rotate %51 by %c1_i32_16 dim 0 : vector<16x128xf32>, i32 -> vector<16x128xf32>
    %56 = arith.cmpf ogt, %55, %0 : vector<16x128xf32>
    %57 = arith.extui %56 : vector<16x128xi1> to vector<16x128xi32>
    %58 = arith.addi %54, %57 : vector<16x128xi32>
    %c14_i32 = arith.constant 14 : i32
    %c1_i32_17 = arith.constant 1 : i32
    %59 = tpu.dynamic_rotate %55 by %c1_i32_17 dim 0 : vector<16x128xf32>, i32 -> vector<16x128xf32>
    %60 = arith.cmpf ogt, %59, %0 : vector<16x128xf32>
    %61 = arith.extui %60 : vector<16x128xi1> to vector<16x128xi32>
    %62 = arith.addi %58, %61 : vector<16x128xi32>
    %63 = vector.broadcast %1 : i32 to vector<16x128xi32>
    %64 = arith.cmpi sle, %62, %63 : vector<16x128xi32>
    %cst = arith.constant 0x7F800000 : f32
    %65 = vector.broadcast %cst : f32 to vector<16x128xf32>
    %66 = arith.select %64, %0, %65 : vector<16x128xi1>, vector<16x128xf32>
    %cst_18 = arith.constant dense<0x7F800000> : vector<128xf32>
    %67 = vector.multi_reduction <minimumf>, %66, %cst_18 [0] : vector<16x128xf32> to vector<128xf32>
    %68 = vector.shape_cast %67 : vector<128xf32> to vector<1x128xf32>
    %c0_19 = arith.constant 0 : index
    %c0_20 = arith.constant 0 : index
    %69 = vector.load %arg3[%c0_19, %c0_20] : memref<1x128xf32, #tpu.memory_space<vmem>>, vector<1x128xf32>
    tpu.vector_store %arg3[%c0_19, %c0_20], %68 {strides = array<i32>} : memref<1x128xf32, #tpu.memory_space<vmem>>, vector<1x128xf32>,
    return
  }
  func.func @transform_0(%arg0: i32, %arg1: memref<1xi32, #tpu.memory_space<smem>>) -> (i32, i32) {
    %c0_i32 = arith.constant 0 : i32
    %c0_i32_0 = arith.constant 0 : i32
    return %c0_i32, %arg0 : i32, i32
  }
  func.func @transform_1(%arg0: i32, %arg1: memref<1xi32, #tpu.memory_space<smem>>) -> (i32, i32) {
    %c0_i32 = arith.constant 0 : i32
    %c0_i32_0 = arith.constant 0 : i32
    return %c0_i32, %arg0 : i32, i32
  }
}

</mosaic_0001>

<llo_original>
// kernel: tpu_custom_call.1
$region0: #{tpu_custom_call.1}
  #allocation0 [shape = 'u32[]', space=smem, size = 0x4, offset = 0x4, fixed_abs, tag = 'smem constant byte address 0x4 - core index']
  #allocation1 [shape = 'u32[72,128]{1,0:T(1,128)}', space=vmem, size = 0x9000, scoped, tag = 'internal scratch']
  #allocation2 [shape = 's32[1]{0}', space=sflag, size = 0x4, scoped, tag = 'scoped memory for tpu_custom_call.1']
  #allocation3 [shape = 's32[1]{0:T(128)S(6)}', space=smem, size = 0x200, scoped, tag = 'prefetched SMEM operand 0']
  %s0 = inlined_call_operand.<no memory space> [shape: s32[1], index: 0, kind: input, shape index: {}]
  %s1 = inlined_call_operand.hbm [shape: f32[16,128], index: 1, kind: input, shape index: {}]
  %s2 = inlined_call_operand.hbm [shape: f32[1,128], index: 2, kind: output, shape index: {}]
  %s3 = sld [smem:[#allocation0]]
  $region18: #{tpu_custom_call.1} parent=0
    _
  %s5 = ssub.s32 1, %s3
  %s6 = scalar_select 0, %s5, %s3
  %7 = sst [smem:[#allocation3]] %s0
  $region1: #{tpu_custom_call.1} parent=0
    #allocation4 [shape = 'u8[8192]{0}', space=vmem, size = 0x2000, scoped, tag = 'input window, operand 1, single buffered']
    #allocation5 [shape = 's32[1]{0}', space=sflag, size = 0x4, scoped, tag = 'scoped memory for tpu_custom_call.1']
    #allocation6 [shape = 's32[1]{0}', space=sflag, size = 0x4, scoped, tag = 'scoped memory for tpu_custom_call.1']
    #allocation7 [shape = 'u8[512]{0}', space=vmem, size = 0x400, scoped, tag = 'output window, operand 0, single buffered']
    %8 = vsyncpa [#allocation5], 0
    %9 = vsyncpa [#allocation6], 0
    // Predicated region
    $region2: #{tpu_custom_call.1} parent=1 // pred_check
      _
    $region3: #{tpu_custom_call.1} parent=1 // pred_check_branch
      %11 = sbr.rel (0) target = $region5
    $region4: #{tpu_custom_call.1} parent=1 // pred_region
      %13 = vsyncadd [#allocation5], 0
      %s14 = sshll.u32 %s1, 4
      %s15 = int_to_ptr.hbm [resolvable:$true] %s14
      %s16 = sshll.u32 [#allocation4], 4
      %s17 = int_to_ptr.vmem [resolvable:$true] %s16
      %22 = dma.hbm_to_vmem [thread:$0]  %s15, 256, %s17, [#allocation5], 128, 128, 8
    $region5: #{tpu_custom_call.1} parent=1 // pred_fallthru
      _
    // Predicated region
    $region6: #{tpu_custom_call.1} parent=1 // pred_check
      _
    $region7: #{tpu_custom_call.1} parent=1 // pred_check_branch
      %24 = sbr.rel (0) target = $region9
    $region8: #{tpu_custom_call.1} parent=1 // pred_region
      %26 = dma.done [#allocation5], 256
    $region9: #{tpu_custom_call.1} parent=1 // pred_fallthru
      _
    %v27 = vld [vmem:[#allocation4] sm:$0xff]
    %v28 = vld [vmem:[#allocation4 + $0x8] sm:$0xff]
    %s29 = sld [smem:[#allocation3]]
    %v30 = vrot.slane %v27, 7
    %v31 = vrot.slane %v28, 7
    %v32 = vlaneseq
    %v33 = vshrl.u32 %v32, 7
    %vm34 = vcmp.lt.s32.totalorder %v33, 1
    %v35 = vsel %vm34, %v30, %v31
    %v36 = vsel %vm34, %v31, %v30
    %vm37 = vcmp.gt.f32.partialorder %v36, %v27
    %vm38 = vcmp.gt.f32.partialorder %v35, %v28
    %v39 = vsel %vm37, 1, 0
    %v40 = vsel %vm38, 1, 0
    %v41 = vrot.slane %v36, 7
    %v42 = vrot.slane %v35, 7
    %v43 = vsel %vm34, %v41, %v42
    %v44 = vsel %vm34, %v42, %v41
    %vm45 = vcmp.gt.f32.partialorder %v44, %v27
    %vm46 = vcmp.gt.f32.partialorder %v43, %v28
    %v47 = vsel %vm45, 1, 0
    %v48 = vsel %vm46, 1, 0
    %v49 = vadd.s32 %v39, %v47
    %v50 = vadd.s32 %v40, %v48
    %v51 = vrot.slane %v44, 7
    %v52 = vrot.slane %v43, 7
    %v53 = vsel %vm34, %v51, %v52
    %v54 = vsel %vm34, %v52, %v51
    %vm55 = vcmp.gt.f32.partialorder %v54, %v27
    %vm56 = vcmp.gt.f32.partialorder %v53, %v28
    %v57 = vsel %vm55, 1, 0
    %v58 = vsel %vm56, 1, 0
    %v59 = vadd.s32 %v49, %v57
    %v60 = vadd.s32 %v50, %v58
    %v61 = vrot.slane %v54, 7
    %v62 = vrot.slane %v53, 7
    %v63 = vsel %vm34, %v61, %v62
    %v64 = vsel %vm34, %v62, %v61
    %vm65 = vcmp.gt.f32.partialorder %v64, %v27
    %vm66 = vcmp.gt.f32.partialorder %v63, %v28
    %v67 = vsel %vm65, 1, 0
    %v68 = vsel %vm66, 1, 0
    %v69 = vadd.s32 %v59, %v67
    %v70 = vadd.s32 %v60, %v68
    %v71 = vrot.slane %v64, 7
    %v72 = vrot.slane %v63, 7
    %v73 = vsel %vm34, %v71, %v72
    %v74 = vsel %vm34, %v72, %v71
    %vm75 = vcmp.gt.f32.partialorder %v74, %v27
    %vm76 = vcmp.gt.f32.partialorder %v73, %v28
    %v77 = vsel %vm75, 1, 0
    %v78 = vsel %vm76, 1, 0
    %v79 = vadd.s32 %v69, %v77
    %v80 = vadd.s32 %v70, %v78
    %v81 = vrot.slane %v74, 7
    %v82 = vrot.slane %v73, 7
    %v83 = vsel %vm34, %v81, %v82
    %v84 = vsel %vm34, %v82, %v81
    %vm85 = vcmp.gt.f32.partialorder %v84, %v27
    %vm86 = vcmp.gt.f32.partialorder %v83, %v28
    %v87 = vsel %vm85, 1, 0
    %v88 = vsel %vm86, 1, 0
    %v89 = vadd.s32 %v79, %v87
    %v90 = vadd.s32 %v80, %v88
    %v91 = vrot.slane %v84, 7
    %v92 = vrot.slane %v83, 7
    %v93 = vsel %vm34, %v91, %v92
    %v94 = vsel %vm34, %v92, %v91
    %vm95 = vcmp.gt.f32.partialorder %v94, %v27
    %vm96 = vcmp.gt.f32.partialorder %v93, %v28
    %v97 = vsel %vm95, 1, 0
    %v98 = vsel %vm96, 1, 0
    %v99 = vadd.s32 %v89, %v97
    %v100 = vadd.s32 %v90, %v98
    %v101 = vrot.slane %v94, 7
    %v102 = vrot.slane %v93, 7
    %v103 = vsel %vm34, %v101, %v102
    %v104 = vsel %vm34, %v102, %v101
    %vm105 = vcmp.gt.f32.partialorder %v104, %v27
    %vm106 = vcmp.gt.f32.partialorder %v103, %v28
    %v107 = vsel %vm105, 1, 0
    %v108 = vsel %vm106, 1, 0
    %v109 = vadd.s32 %v99, %v107
    %v110 = vadd.s32 %v100, %v108
    %v111 = vrot.slane %v104, 7
    %v112 = vrot.slane %v103, 7
    %v113 = vsel %vm34, %v111, %v112
    %v114 = vsel %vm34, %v112, %v111
    %vm115 = vcmp.gt.f32.partialorder %v114, %v27
    %vm116 = vcmp.gt.f32.partialorder %v113, %v28
    %v117 = vsel %vm115, 1, 0
    %v118 = vsel %vm116, 1, 0
    %v119 = vadd.s32 %v109, %v117
    %v120 = vadd.s32 %v110, %v118
    %v121 = vrot.slane %v114, 7
    %v122 = vrot.slane %v113, 7
    %v123 = vsel %vm34, %v121, %v122
    %v124 = vsel %vm34, %v122, %v121
    %vm125 = vcmp.gt.f32.partialorder %v124, %v27
    %vm126 = vcmp.gt.f32.partialorder %v123, %v28
    %v127 = vsel %vm125, 1, 0
    %v128 = vsel %vm126, 1, 0
    %v129 = vadd.s32 %v119, %v127
    %v130 = vadd.s32 %v120, %v128
    %v131 = vrot.slane %v124, 7
    %v132 = vrot.slane %v123, 7
    %v133 = vsel %vm34, %v131, %v132
    %v134 = vsel %vm34, %v132, %v131
    %vm135 = vcmp.gt.f32.partialorder %v134, %v27
    %vm136 = vcmp.gt.f32.partialorder %v133, %v28
    %v137 = vsel %vm135, 1, 0
    %v138 = vsel %vm136, 1, 0
    %v139 = vadd.s32 %v129, %v137
    %v140 = vadd.s32 %v130, %v138
    %v141 = vrot.slane %v134, 7
    %v142 = vrot.slane %v133, 7
    %v143 = vsel %vm34, %v141, %v142
    %v144 = vsel %vm34, %v142, %v141
    %vm145 = vcmp.gt.f32.partialorder %v144, %v27
    %vm146 = vcmp.gt.f32.partialorder %v143, %v28
    %v147 = vsel %vm145, 1, 0
    %v148 = vsel %vm146, 1, 0
    %v149 = vadd.s32 %v139, %v147
    %v150 = vadd.s32 %v140, %v148
    %v151 = vrot.slane %v144, 7
    %v152 = vrot.slane %v143, 7
    %v153 = vsel %vm34, %v151, %v152
    %v154 = vsel %vm34, %v152, %v151
    %vm155 = vcmp.gt.f32.partialorder %v154, %v27
    %vm156 = vcmp.gt.f32.partialorder %v153, %v28
    %v157 = vsel %vm155, 1, 0
    %v158 = vsel %vm156, 1, 0
    %v159 = vadd.s32 %v149, %v157
    %v160 = vadd.s32 %v150, %v158
    %v161 = vrot.slane %v154, 7
    %v162 = vrot.slane %v153, 7
    %v163 = vsel %vm34, %v161, %v162
    %v164 = vsel %vm34, %v162, %v161
    %vm165 = vcmp.gt.f32.partialorder %v164, %v27
    %vm166 = vcmp.gt.f32.partialorder %v163, %v28
    %v167 = vsel %vm165, 1, 0
    %v168 = vsel %vm166, 1, 0
    %v169 = vadd.s32 %v159, %v167
    %v170 = vadd.s32 %v160, %v168
    %v171 = vrot.slane %v164, 7
    %v172 = vrot.slane %v163, 7
    %v173 = vsel %vm34, %v171, %v172
    %v174 = vsel %vm34, %v172, %v171
    %vm175 = vcmp.gt.f32.partialorder %v174, %v27
    %vm176 = vcmp.gt.f32.partialorder %v173, %v28
    %v177 = vsel %vm175, 1, 0
    %v178 = vsel %vm176, 1, 0
    %v179 = vadd.s32 %v169, %v177
    %v180 = vadd.s32 %v170, %v178
    %v181 = vstv %s29
    %vm182 = vcmp.le.s32.totalorder %v179, %v181
    %vm183 = vcmp.le.s32.totalorder %v180, %v181
    %v184 = vsel %vm182, %v27, inf
    %v185 = vsel %vm183, %v28, inf
    %v186 = vmin.f32 %v184, %v185
    %v187 = vrot.slane %v186, 4
    %v188 = vmin.f32 %v186, %v187
    %v189 = vrot.slane %v188, 2
    %v190 = vmin.f32 %v188, %v189
    %v191 = vrot.slane %v190, 1
    %v192 = vmin.f32 %v190, %v191
    %193 = vst [vmem:[#allocation7] sm:$0x1] %v192
    // Predicated region
    $region10: #{tpu_custom_call.1} parent=1 // pred_check
      _
    $region11: #{tpu_custom_call.1} parent=1 // pred_check_branch
      %195 = sbr.rel (0) target = $region13
    $region12: #{tpu_custom_call.1} parent=1 // pred_region
      %197 = vsyncadd [#allocation6], 0
      %s199 = sshll.u32 [#allocation7], 4
      %s200 = int_to_ptr.vmem [resolvable:$true] %s199
      %s201 = sshll.u32 %s2, 4
      %s202 = int_to_ptr.hbm [resolvable:$true] %s201
      %204 = dma.vmem_to_hbm [thread:$0]  %s200, 16, %s202, [#allocation6]
    $region13: #{tpu_custom_call.1} parent=1 // pred_fallthru
      _
    // Predicated region
    $region14: #{tpu_custom_call.1} parent=1 // pred_check
      _
    $region15: #{tpu_custom_call.1} parent=1 // pred_check_branch
      %206 = sbr.rel (0) target = $region17
    $region16: #{tpu_custom_call.1} parent=1 // pred_region
      %208 = dma.done [#allocation6], 16
    $region17: #{tpu_custom_call.1} parent=1 // pred_fallthru
      _
    %209 = vsyncpa [#allocation5], 1
    %210 = vsyncpa [#allocation6], 1

</llo_original>
